<compile_context>
chip_gen: v7x
topology: tpu7x:2x2x1
jax: 0.10.0
libtpu: 0.0.40
codegen_flags: <defaults>
</compile_context>

<pallas_src>
import jax
import jax.numpy as jnp
from jax import lax
from jax.experimental import pallas as pl
from jax.experimental.pallas import tpu as pltpu


def _round_up(x, m):
    return (x + m - 1) // m * m


def _vmem_block_bytes(shape, dtype):
    """VMEM footprint of one 2-D block, honoring (8, 128) sublane/lane tiling."""
    rows = _round_up(max(int(shape[-2]), 1), 8) if len(shape) >= 2 else 8
    cols = _round_up(max(int(shape[-1]), 1), 128)
    lead = 1
    for s in shape[:-2]:
        lead *= int(s)
    return lead * rows * cols * jnp.dtype(dtype).itemsize


def _vmem_limit(block_bytes):
    # Never lower the scoped default; raise it toward (but below) v7x's 64 MiB.
    return int(min(max(block_bytes + (2 << 20), 32 << 20), 56 << 20))


# ---------------------------------------------------------------------------
# Generic row-tiled Linear + bias, with the batch replication folded into the
# output grid:  out[b] = x @ W + bias   for b in range(batch).
# ---------------------------------------------------------------------------
def _linear_bcast_kernel(x_ref, w_ref, b_ref, o_ref):
    y = jnp.dot(x_ref[...], w_ref[...], preferred_element_type=jnp.float32)
    o_ref[...] = (y + b_ref[...]).astype(o_ref.dtype)


def linear_bcast_pallas(x, w, b, *, batch, row_tile=2048, compute_dtype=None):
    """x: (N, din), w: (din, dout), b: (dout,) -> (batch, N, dout).

    Ragged N handled with a partial last block (no jnp.pad copy); dout is not
    padded (no output slice); the bs replication is produced directly by the
    pipelined kernel stores (no jnp.tile).
    """
    N, din = x.shape
    din_w, dout = w.shape
    assert din == din_w, (din, din_w)
    out_dtype = x.dtype

    if compute_dtype is not None:           # e.g. jnp.bfloat16 on v6e/v7x
        x = x.astype(compute_dtype)
        w = w.astype(compute_dtype)
    b2 = b.reshape(1, dout).astype(jnp.float32)

    tm = N if N <= row_tile else _round_up(row_tile, 8)
    n_tiles = pl.cdiv(N, tm)

    vmem_need = (2 * _vmem_block_bytes((tm, din), x.dtype)
                 + 2 * _vmem_block_bytes((din, dout), w.dtype)
                 + 2 * _vmem_block_bytes((1, dout), jnp.float32)
                 + 2 * _vmem_block_bytes((tm, dout), out_dtype))

    isz = jnp.dtype(x.dtype).itemsize
    osz = jnp.dtype(out_dtype).itemsize
    cost = pl.CostEstimate(
        flops=2 * batch * N * din * dout,
        transcendentals=0,
        bytes_accessed=(N * din * isz + din * dout * isz + dout * 4
                        + batch * N * dout * osz))

    return pl.pallas_call(
        _linear_bcast_kernel,
        out_shape=jax.ShapeDtypeStruct((batch, N, dout), out_dtype),
        grid_spec=pltpu.PrefetchScalarGridSpec(
            num_scalar_prefetch=0,
            # row tile outer, batch inner: the x tile index is unchanged across
            # the inner bs steps, so it is revisited instead of re-fetched.
            grid=(n_tiles, batch),
            in_specs=[
                pl.BlockSpec((tm, din), lambda i, bb: (i, 0)),
                pl.BlockSpec((din, dout), lambda i, bb: (0, 0)),
                pl.BlockSpec((1, dout), lambda i, bb: (0, 0)),
            ],
            out_specs=pl.BlockSpec((None, tm, dout), lambda i, bb: (bb, i, 0)),
        ),
        compiler_params=pltpu.CompilerParams(
            dimension_semantics=("parallel", "parallel"),
            vmem_limit_bytes=_vmem_limit(vmem_need)),
        cost_estimate=cost,
    )(x, w, b2)


# ---------------------------------------------------------------------------
# Grid-node embedding, native layout:
#   gx:   (bs, F, N)  with F = t*c, N = h*w   (plain contiguous reshape of input)
#   surf: (S, N)      rows 0/1 = geopotential_surface / land_sea_mask,
#                     rows 2..S-1 are zero padding (S=8 keeps sublanes aligned)
#   wf:   (F, E)      weight rows for the t*c data channels
#   ws:   (S, E)      weight rows for the surface channels (zero-padded)
#   out:  (bs, N, E)  == Linear(concat([gx^T, geo, lsm], -1))
# ---------------------------------------------------------------------------
def _grid_embed_kernel(gx_ref, surf_ref, wf_ref, ws_ref, b_ref, o_ref):
    tdims = (((0,), (0,)), ((), ()))      # contract the channel (sublane) axis
    y = lax.dot_general(gx_ref[...], wf_ref[...], tdims,
                        preferred_element_type=jnp.float32)
    y = y + lax.dot_general(surf_ref[...], ws_ref[...], tdims,
                            preferred_element_type=jnp.float32)
    o_ref[...] = (y + b_ref[...]).astype(o_ref.dtype)


def grid_embed_pallas(gx, surf, wf, ws, bias, *, col_tile=2048, compute_dtype=None):
    bs, F, N = gx.shape
    S, N_s = surf.shape
    Fw, E = wf.shape
    assert Fw == F and N_s == N and ws.shape == (S, E), (gx.shape, surf.shape, wf.shape, ws.shape)
    out_dtype = gx.dtype

    if compute_dtype is not None:
        gx = gx.astype(compute_dtype)
        surf = surf.astype(compute_dtype)
        wf = wf.astype(compute_dtype)
        ws = ws.astype(compute_dtype)
    b2 = bias.reshape(1, E).astype(jnp.float32)

    tn = N if N <= col_tile else _round_up(col_tile, 128)
    n_tiles = pl.cdiv(N, tn)

    vmem_need = (2 * _vmem_block_bytes((F, tn), gx.dtype)
                 + 2 * _vmem_block_bytes((S, tn), surf.dtype)
                 + 2 * _vmem_block_bytes((F, E), wf.dtype)
                 + 2 * _vmem_block_bytes((S, E), ws.dtype)
                 + 2 * _vmem_block_bytes((1, E), jnp.float32)
                 + 2 * _vmem_block_bytes((tn, E), out_dtype))

    isz = jnp.dtype(gx.dtype).itemsize
    osz = jnp.dtype(out_dtype).itemsize
    cost = pl.CostEstimate(
        flops=2 * bs * N * (F + S) * E,
        transcendentals=0,
        bytes_accessed=(bs * F * N * isz + S * N * isz + (F + S) * E * isz
                        + E * 4 + bs * N * E * osz))

    return pl.pallas_call(
        _grid_embed_kernel,
        out_shape=jax.ShapeDtypeStruct((bs, N, E), out_dtype),
        grid_spec=pltpu.PrefetchScalarGridSpec(
            num_scalar_prefetch=0,
            grid=(bs, n_tiles),
            in_specs=[
                pl.BlockSpec((None, F, tn), lambda bb, i: (bb, 0, i)),
                pl.BlockSpec((S, tn), lambda bb, i: (0, i)),
                pl.BlockSpec((F, E), lambda bb, i: (0, 0)),
                pl.BlockSpec((S, E), lambda bb, i: (0, 0)),
                pl.BlockSpec((1, E), lambda bb, i: (0, 0)),
            ],
            out_specs=pl.BlockSpec((None, tn, E), lambda bb, i: (bb, i, 0)),
        ),
        compiler_params=pltpu.CompilerParams(
            dimension_semantics=("parallel", "parallel"),
            vmem_limit_bytes=_vmem_limit(vmem_need)),
        cost_estimate=cost,
    )(gx, surf, wf, ws, b2)


# ---------------------------------------------------------------------------
# Module wrapper
# ---------------------------------------------------------------------------
_SURF_PAD = 8   # pad the 2 static surface channels up to one sublane group


class FeatEmbeddingPallas:
    """JAX/Pallas equivalent of FeatEmbedding.forward."""

    def __init__(self, *, batch_size, t, c, h, w,
                 mesh_node_dim, edge_dim,
                 grid_node_embed_dim, mesh_node_embed_dim, edge_embed_dim,
                 key, compute_dtype=None):
        del batch_size  # batch replication is taken from gx at call time
        self.compute_dtype = compute_dtype
        F = t * c
        mdim, edim = mesh_node_dim, edge_dim
        gemb, memb, eemb = grid_node_embed_dim, mesh_node_embed_dim, edge_embed_dim

        ks = jax.random.split(key, 12)

        def lin(kw, kb, din, dout):
            W = jax.random.normal(kw, (din, dout), jnp.float32) * (1.0 / jnp.sqrt(din))
            B = jax.random.normal(kb, (dout,), jnp.float32) * 0.01
            return W, B

        # grid weight split into data-channel rows and (padded) surface rows
        w_g, self.b_g = lin(ks[0], ks[1], F + 2, gemb)
        self.w_g_feat = w_g[:F]                                        # (F, gemb)
        self.w_g_surf = jnp.zeros((_SURF_PAD, gemb), jnp.float32).at[:2].set(w_g[F:])

        self.w_m,    self.b_m    = lin(ks[2], ks[3], mdim, memb)
        self.w_me,   self.b_me   = lin(ks[4], ks[5], edim, eemb)
        self.w_g2me, self.b_g2me = lin(ks[6], ks[7], edim, eemb)
        self.w_m2ge, self.b_m2ge = lin(ks[8], ks[9], edim, eemb)

        # TODO(synk): real module loads geopotential_surface / land_sea_mask from
        # .npz files; synthesized deterministically here (no file I/O allowed).
        n_grid = h * w
        geo = jax.random.normal(ks[10], (n_grid,), jnp.float32)
        lsm = (jax.random.uniform(ks[11], (n_grid,)) > 0.5).astype(jnp.float32)
        self.surf = jnp.zeros((_SURF_PAD, n_grid), jnp.float32).at[0].set(geo).at[1].set(lsm)

    def __call__(self, gx, mx, me_i, me_x, g2me_i, g2me_x, m2ge_i, m2ge_x):
        bs, t, c, h, w = gx.shape
        gx3 = gx.reshape(bs, t * c, h * w)       # contiguous reshape: no copy
        cd = self.compute_dtype

        gx_emb = grid_embed_pallas(gx3, self.surf, self.w_g_feat, self.w_g_surf,
                                   self.b_g, compute_dtype=cd)
        mx_emb   = linear_bcast_pallas(mx,     self.w_m,    self.b_m,    batch=bs, compute_dtype=cd)
        me_emb   = linear_bcast_pallas(me_x,   self.w_me,   self.b_me,   batch=bs, compute_dtype=cd)
        g2me_emb = linear_bcast_pallas(g2me_x, self.w_g2me, self.b_g2me, batch=bs, compute_dtype=cd)
        m2ge_emb = linear_bcast_pallas(m2ge_x, self.w_m2ge, self.b_m2ge, batch=bs, compute_dtype=cd)

        return (gx_emb, mx_emb, me_i, me_emb, g2me_i, g2me_emb, m2ge_i, m2ge_emb)


def _reference_forward(model, gx, mx, me_x, g2me_x, m2ge_x):
    bs, t, c, h, w = gx.shape
    g = jnp.swapaxes(gx.reshape(bs, t * c, h * w), 1, 2)
    surf = jnp.broadcast_to(model.surf[:2].T[None], (bs, h * w, 2))
    g = jnp.concatenate([g, surf], axis=-1)
    w_full = jnp.concatenate([model.w_g_feat, model.w_g_surf[:2]], axis=0)
    gx_out = jnp.dot(g, w_full) + model.b_g

    def rep(x, W, B):
        return jnp.tile((jnp.dot(x, W) + B)[None], (bs, 1, 1))

    return (gx_out,
            rep(mx, model.w_m, model.b_m),
            rep(me_x, model.w_me, model.b_me),
            rep(g2me_x, model.w_g2me, model.b_g2me),
            rep(m2ge_x, model.w_m2ge, model.b_m2ge))


if __name__ == "__main__":
    key = jax.random.PRNGKey(0)
    (k_params, k_gx, k_mx, k_mex, k_g2mex, k_m2gex, k_aux) = jax.random.split(key, 7)

    # small, forward-consistent shapes
    BS, T, C, H, W = 2, 2, 4, 16, 16            # gx: [2, 2, 4, 16, 16], gdim = 2*4+2 = 10
    MDIM, EDIM = 3, 4
    GEMB, MEMB, EEMB = 32, 16, 16
    N_MESH = 64
    N_ME, N_G2ME, N_M2GE = 48, 96, 80

    model = FeatEmbeddingPallas(
        batch_size=BS, t=T, c=C, h=H, w=W,
        mesh_node_dim=MDIM, edge_dim=EDIM,
        grid_node_embed_dim=GEMB, mesh_node_embed_dim=MEMB, edge_embed_dim=EEMB,
        key=k_params)

    gx = jax.random.normal(k_gx, (BS, T, C, H, W), jnp.float32)
    mx = jax.random.normal(k_mx, (N_MESH, MDIM), jnp.float32)
    me_i = jnp.stack([jnp.arange(N_ME, dtype=jnp.int32) % N_MESH,
                      (jnp.arange(N_ME, dtype=jnp.int32) + 1) % N_MESH])
    me_x = jax.random.normal(k_mex, (N_ME, EDIM), jnp.float32)
    g2me_i = jnp.stack([jnp.arange(N_G2ME, dtype=jnp.int32) % (H * W),
                        jnp.arange(N_G2ME, dtype=jnp.int32) % N_MESH])
    g2me_x = jax.random.normal(k_g2mex, (N_G2ME, EDIM), jnp.float32)
    m2ge_i = jnp.stack([jnp.arange(N_M2GE, dtype=jnp.int32) % N_MESH,
                        jnp.arange(N_M2GE, dtype=jnp.int32) % (H * W)])
    m2ge_x = jax.random.normal(k_m2gex, (N_M2GE, EDIM), jnp.float32)

    out = model(gx, mx, me_i, me_x, g2me_i, g2me_x, m2ge_i, m2ge_x)
    out = jax.block_until_ready(out)

    gx_o, mx_o, me_i_o, me_o, g2me_i_o, g2me_o, m2ge_i_o, m2ge_o = out
    assert gx_o.shape == (BS, H * W, GEMB), gx_o.shape
    assert mx_o.shape == (BS, N_MESH, MEMB), mx_o.shape
    assert me_o.shape == (BS, N_ME, EEMB), me_o.shape
    assert g2me_o.shape == (BS, N_G2ME, EEMB), g2me_o.shape
    assert m2ge_o.shape == (BS, N_M2GE, EEMB), m2ge_o.shape

    # correctness vs pure-JAX reference (f32 path -> tight tolerance)
    ref = _reference_forward(model, gx, mx, me_x, g2me_x, m2ge_x)
    errs = [float(jnp.max(jnp.abs(a - b))) for a, b in
            zip((gx_o, mx_o, me_o, g2me_o, m2ge_o), ref)]
    assert max(errs) < 1e-3, f"mismatch vs reference: {errs}"

    # pass-through index tensors must be identical
    assert bool(jnp.array_equal(me_i_o, me_i))
    assert bool(jnp.array_equal(g2me_i_o, g2me_i))
    assert bool(jnp.array_equal(m2ge_i_o, m2ge_i))

    # --- extra checks: ragged sizes exercise the partial-last-block paths ----
    kx, kw, kb, kg, ks2 = jax.random.split(k_aux, 5)
    xr = jax.random.normal(kx, (200, 4), jnp.float32)          # 200 = 3*64 + 8
    wr = jax.random.normal(kw, (4, 24), jnp.float32)
    br = jax.random.normal(kb, (24,), jnp.float32)
    yr = jax.block_until_ready(linear_bcast_pallas(xr, wr, br, batch=2, row_tile=64))
    yr_ref = jnp.tile((xr @ wr + br)[None], (2, 1, 1))
    assert float(jnp.max(jnp.abs(yr - yr_ref))) < 1e-3

    gxr = jax.random.normal(kg, (1, 8, 200), jnp.float32)      # 200 = 128 + 72
    surfr = jnp.zeros((_SURF_PAD, 200), jnp.float32).at[:2].set(
        jax.random.normal(ks2, (2, 200), jnp.float32))
    wfr = jax.random.normal(kw, (8, 24), jnp.float32)
    wsr = jnp.zeros((_SURF_PAD, 24), jnp.float32).at[:2].set(
        jax.random.normal(kb, (2, 24), jnp.float32))
    yg = jax.block_until_ready(grid_embed_pallas(gxr, surfr, wfr, wsr, br, col_tile=128))
    yg_ref = (jnp.einsum("bfn,fe->bne", gxr, wfr)
              + (surfr.T @ wsr)[None] + br)
    assert float(jnp.max(jnp.abs(yg - yg_ref))) < 1e-3

    print("KERNEL_OK")
</pallas_src>

<mosaic_0001>
module attributes {stable_mosaic.version = 11 : i64} {
  func.func @_grid_embed_kernel(%arg0: i32, %arg1: i32, %arg2: memref<1x8x256xf32, #tpu.memory_space<vmem>>, %arg3: memref<8x256xf32, #tpu.memory_space<vmem>>, %arg4: memref<8x32xf32, #tpu.memory_space<vmem>>, %arg5: memref<8x32xf32, #tpu.memory_space<vmem>>, %arg6: memref<1x32xf32, #tpu.memory_space<vmem>>, %arg7: memref<1x256x32xf32, #tpu.memory_space<vmem>>) attributes {dimension_semantics = [#tpu.dimension_semantics<parallel>, #tpu.dimension_semantics<parallel>], iteration_bounds = array<i64: 2, 1>, scalar_prefetch = 0 : i64, scratch_operands = 0 : i64, tpu.core_type = #tpu.core_type<tc>, window_params = [{transform_indices = @transform_0, window_bounds = array<i64: 1, 8, 256>}, {transform_indices = @transform_1, window_bounds = array<i64: 8, 256>}, {pipeline_mode = #tpu.pipeline_mode<synchronous>, transform_indices = @transform_2, window_bounds = array<i64: 8, 32>}, {pipeline_mode = #tpu.pipeline_mode<synchronous>, transform_indices = @transform_3, window_bounds = array<i64: 8, 32>}, {pipeline_mode = #tpu.pipeline_mode<synchronous>, transform_indices = @transform_4, window_bounds = array<i64: 1, 32>}, {transform_indices = @transform_5, window_bounds = array<i64: 1, 256, 32>}]} {
    %c0 = arith.constant 0 : index
    %c0_0 = arith.constant 0 : index
    %c0_1 = arith.constant 0 : index
    %0 = vector.load %arg2[%c0, %c0_0, %c0_1] : memref<1x8x256xf32, #tpu.memory_space<vmem>>, vector<1x8x256xf32>
    %1 = vector.shape_cast %0 : vector<1x8x256xf32> to vector<8x256xf32>
    %c0_2 = arith.constant 0 : index
    %c0_3 = arith.constant 0 : index
    %2 = vector.load %arg4[%c0_2, %c0_3] : memref<8x32xf32, #tpu.memory_space<vmem>>, vector<8x32xf32>
    %cst = arith.constant dense<0.000000e+00> : vector<256x32xf32>
    %3 = tpu.matmul %1, %2, %cst {dimension_numbers = #tpu.dot_dimension_numbers<[0], [0], [1], [1], [0, 1, 1, 1], [], []>} : vector<8x256xf32>, vector<8x32xf32>, vector<256x32xf32> -> vector<256x32xf32>
    %c0_4 = arith.constant 0 : index
    %c0_5 = arith.constant 0 : index
    %4 = vector.load %arg3[%c0_4, %c0_5] : memref<8x256xf32, #tpu.memory_space<vmem>>, vector<8x256xf32>
    %c0_6 = arith.constant 0 : index
    %c0_7 = arith.constant 0 : index
    %5 = vector.load %arg5[%c0_6, %c0_7] : memref<8x32xf32, #tpu.memory_space<vmem>>, vector<8x32xf32>
    %cst_8 = arith.constant dense<0.000000e+00> : vector<256x32xf32>
    %6 = tpu.matmul %4, %5, %cst_8 {dimension_numbers = #tpu.dot_dimension_numbers<[0], [0], [1], [1], [0, 1, 1, 1], [], []>} : vector<8x256xf32>, vector<8x32xf32>, vector<256x32xf32> -> vector<256x32xf32>
    %7 = arith.addf %3, %6 : vector<256x32xf32>
    %c0_9 = arith.constant 0 : index
    %c0_10 = arith.constant 0 : index
    %8 = vector.load %arg6[%c0_9, %c0_10] : memref<1x32xf32, #tpu.memory_space<vmem>>, vector<1x32xf32>
    %9 = vector.broadcast %8 : vector<1x32xf32> to vector<256x32xf32>
    %10 = arith.addf %7, %9 : vector<256x32xf32>
    %c0_11 = arith.constant 0 : index
    %c0_12 = arith.constant 0 : index
    %c0_13 = arith.constant 0 : index
    %11 = vector.load %arg7[%c0_11, %c0_12, %c0_13] : memref<1x256x32xf32, #tpu.memory_space<vmem>>, vector<1x256x32xf32>
    %12 = vector.shape_cast %11 : vector<1x256x32xf32> to vector<256x32xf32>
    %13 = vector.shape_cast %10 : vector<256x32xf32> to vector<1x256x32xf32>
    tpu.vector_store %arg7[%c0_11, %c0_12, %c0_13], %13 {strides = array<i32>} : memref<1x256x32xf32, #tpu.memory_space<vmem>>, vector<1x256x32xf32>,
    return
  }
  func.func @transform_0(%arg0: i32, %arg1: i32) -> (i32, i32, i32) {
    %c0_i32 = arith.constant 0 : i32
    %c0_i32_0 = arith.constant 0 : i32
    return %arg0, %c0_i32, %arg1 : i32, i32, i32
  }
  func.func @transform_1(%arg0: i32, %arg1: i32) -> (i32, i32) {
    %c0_i32 = arith.constant 0 : i32
    %c0_i32_0 = arith.constant 0 : i32
    return %c0_i32, %arg1 : i32, i32
  }
  func.func @transform_2(%arg0: i32, %arg1: i32) -> (i32, i32) {
    %c0_i32 = arith.constant 0 : i32
    %c0_i32_0 = arith.constant 0 : i32
    %c0_i32_1 = arith.constant 0 : i32
    return %c0_i32, %c0_i32_0 : i32, i32
  }
  func.func @transform_3(%arg0: i32, %arg1: i32) -> (i32, i32) {
    %c0_i32 = arith.constant 0 : i32
    %c0_i32_0 = arith.constant 0 : i32
    %c0_i32_1 = arith.constant 0 : i32
    return %c0_i32, %c0_i32_0 : i32, i32
  }
  func.func @transform_4(%arg0: i32, %arg1: i32) -> (i32, i32) {
    %c0_i32 = arith.constant 0 : i32
    %c0_i32_0 = arith.constant 0 : i32
    %c0_i32_1 = arith.constant 0 : i32
    return %c0_i32, %c0_i32_0 : i32, i32
  }
  func.func @transform_5(%arg0: i32, %arg1: i32) -> (i32, i32, i32) {
    %c0_i32 = arith.constant 0 : i32
    %c0_i32_0 = arith.constant 0 : i32
    return %arg0, %arg1, %c0_i32 : i32, i32, i32
  }
}

</mosaic_0001>

<llo_original>
// kernel: tpu_custom_call.1
$region0: #{tpu_custom_call.1}
  #allocation0 [shape = 'u32[]', space=smem, size = 0x4, offset = 0x4, fixed_abs, tag = 'smem constant byte address 0x4 - core index']
  #allocation1 [shape = 'u32[144,128]{1,0:T(1,128)}', space=vmem, size = 0x12000, scoped, tag = 'internal scratch']
  %s0 = inlined_call_operand.hbm [shape: f32[2,8,256], index: 0, kind: input, shape index: {}]
  %s1 = inlined_call_operand.hbm [shape: f32[8,256], index: 1, kind: input, shape index: {}]
  %s2 = inlined_call_operand.hbm [shape: f32[8,32], index: 2, kind: input, shape index: {}]
  %s3 = inlined_call_operand.vmem [shape: f32[8,32], index: 3, kind: input, shape index: {}]
  %s4 = inlined_call_operand.vmem [shape: f32[1,32], index: 4, kind: input, shape index: {}]
  %s5 = inlined_call_operand.vmem [shape: f32[2,256,32], index: 5, kind: output, shape index: {}]
  %s6 = sld [smem:[#allocation0]]
  $region65: #{tpu_custom_call.1} parent=0
    _
  %s8 = ssub.s32 1, %s6
  %s9 = scalar_select 0, %s8, %s6
  $region1: #{tpu_custom_call.1} parent=0
    #allocation2 [shape = 'u8[16384]{0}', space=vmem, size = 0x4000, scoped, tag = 'input window, operand 0']
    #allocation3 [shape = 's32[2]{0}', space=sflag, size = 0x8, scoped, tag = 'scoped memory for tpu_custom_call.1']
    #allocation4 [shape = 'u8[8192]{0}', space=vmem, size = 0x2000, scoped, tag = 'input window, operand 1, single buffered']
    #allocation5 [shape = 's32[1]{0}', space=sflag, size = 0x4, scoped, tag = 'scoped memory for tpu_custom_call.1']
    #allocation6 [shape = 'u8[4096]{0}', space=vmem, size = 0x1000, scoped, tag = 'input window, operand 2, single buffered']
    %10 = vsyncpa [#allocation3], 0
    %s11 = scalar_lea.sflag [#allocation3], 1
    %12 = vsyncpa %s11, 0
    %13 = vsyncpa [#allocation5], 0
    loop: start=0, step=1, limit=4
    $region2: #{tpu_custom_call.1} parent=1 // loop_pre_header
      _
    $region3: #{tpu_custom_call.1} parent=1 // loop_header
      %s15 = sphi 0, %s19
      %p16 = scmp.ge.s32.totalorder %s15, 4
      %s22 = sphi 0, %s34
      %s23 = sphi 0, %s30
      %s24 = sphi 0, %s22
      %s25 = sphi 0, %s23
      %s26 = sphi 0, %s24
      %s27 = sphi 0, %s25
      %s39 = sphi 0, %s41
      %s42 = sphi 0, %s39
      %s43 = sphi 0, %s42
      %s59 = sphi 0, %s43
      %s65 = sphi 0, %s67
      %s68 = sphi 0, %s65
      %s69 = sphi 0, %s68
      %s85 = sphi 0, %s69
      %s89 = sphi 0, %s89
      %s91 = sphi 0, %s89
      %s92 = sphi 0, %s91
      %s106 = sphi 0, %s92
      %s110 = sphi 0, %s110
      %s112 = sphi 0, %s110
      %s113 = sphi 0, %s112
      %s127 = sphi 0, %s113
      %s131 = sphi 0, %s131
      %s133 = sphi 0, %s131
      %s134 = sphi 0, %s133
      %s148 = sphi 0, %s134
      %s156 = sphi 0, %s158
      %s159 = sphi 0, %s156
      %s160 = sphi 0, %s159
      %s176 = sphi 0, %s160
    $region4: #{tpu_custom_call.1} parent=1 // loop_header_branch
      %18 = sbr.rel (%p16) target = $region8
    $region5: #{tpu_custom_call.1} parent=1 // loop_body
      %s20 = ssub.s32 %s15, 1
      %s21 = ssub.s32 %s15, 2
      %s28 = sadd.s32 1, %s23
      %p29 = scmp.ge.s32.totalorder %s28, 1
      %s30 = scalar_select %p29, 0, %s28
      %s31 = sadd.s32 1, %s22
      %s32 = scalar_select %p29, %s31, %s22
      %p33 = scmp.ge.s32.totalorder %s32, 2
      %s34 = scalar_select %p33, 0, %s32
      %s35 = ssub.s32 %s22, %s34
      %s36 = ssub.s32 %s23, %s30
      %s37 = sor.u32 %s35, %s36
      %p38 = scmp.eq.s32.totalorder %s37, 0
      %s40 = sadd.s32 %s39, 1
      %s41 = scalar_select %p38, %s39, %s40
      %p44 = pneg %p38
      %p45 = scmp.eq.s32.totalorder %s15, 1
      %p46 = por %p44, %p45
      %p47 = scmp.ne.s32.totalorder %s39, %s42
      %p48 = scmp.eq.s32.totalorder %s15, 0
      %p49 = por %p47, %p48
      %p50 = scmp.ne.s32.totalorder %s39, %s42
      %p51 = scmp.eq.s32.totalorder %s20, 1
      %p52 = por %p50, %p51
      %p53 = scmp.ne.s32.totalorder %s42, %s43
      %p54 = scmp.eq.s32.totalorder %s20, 0
      %p55 = por %p53, %p54
      %p56 = scmp.ne.s32.totalorder %s42, %s43
      %p57 = scmp.eq.s32.totalorder %s21, 1
      %p58 = por %p56, %p57
      %p60 = scmp.ne.s32.totalorder %s43, %s59
      %p61 = scmp.eq.s32.totalorder %s21, 0
      %p62 = por %p60, %p61
      %s63 = ssub.s32 %s23, %s30
      %p64 = scmp.eq.s32.totalorder %s63, 0
      %s66 = sadd.s32 %s65, 1
      %s67 = scalar_select %p64, %s65, %s66
      %p70 = pneg %p64
      %p71 = scmp.eq.s32.totalorder %s15, 1
      %p72 = por %p70, %p71
      %p73 = scmp.ne.s32.totalorder %s65, %s68
      %p74 = scmp.eq.s32.totalorder %s15, 0
      %p75 = por %p73, %p74
      %p76 = scmp.ne.s32.totalorder %s65, %s68
      %p77 = scmp.eq.s32.totalorder %s20, 1
      %p78 = por %p76, %p77
      %p79 = scmp.ne.s32.totalorder %s68, %s69
      %p80 = scmp.eq.s32.totalorder %s20, 0
      %p81 = por %p79, %p80
      %p82 = scmp.ne.s32.totalorder %s68, %s69
      %p83 = scmp.eq.s32.totalorder %s21, 1
      %p84 = por %p82, %p83
      %p86 = scmp.ne.s32.totalorder %s69, %s85
      %p87 = scmp.eq.s32.totalorder %s21, 0
      %p88 = por %p86, %p87
      %s90 = sadd.s32 %s89, 1
      %p93 = scmp.eq.s32.totalorder %s15, 1
      %p94 = scmp.ne.s32.totalorder %s89, %s91
      %p95 = scmp.eq.s32.totalorder %s15, 0
      %p96 = por %p94, %p95
      %p97 = scmp.ne.s32.totalorder %s89, %s91
      %p98 = scmp.eq.s32.totalorder %s20, 1
      %p99 = por %p97, %p98
      %p100 = scmp.ne.s32.totalorder %s91, %s92
      %p101 = scmp.eq.s32.totalorder %s20, 0
      %p102 = por %p100, %p101
      %p103 = scmp.ne.s32.totalorder %s91, %s92
      %p104 = scmp.eq.s32.totalorder %s21, 1
      %p105 = por %p103, %p104
      %p107 = scmp.ne.s32.totalorder %s92, %s106
      %p108 = scmp.eq.s32.totalorder %s21, 0
      %p109 = por %p107, %p108
      %s111 = sadd.s32 %s110, 1
      %p114 = scmp.eq.s32.totalorder %s15, 1
      %p115 = scmp.ne.s32.totalorder %s110, %s112
      %p116 = scmp.eq.s32.totalorder %s15, 0
      %p117 = por %p115, %p116
      %p118 = scmp.ne.s32.totalorder %s110, %s112
      %p119 = scmp.eq.s32.totalorder %s20, 1
      %p120 = por %p118, %p119
      %p121 = scmp.ne.s32.totalorder %s112, %s113
      %p122 = scmp.eq.s32.totalorder %s20, 0
      %p123 = por %p121, %p122
      %p124 = scmp.ne.s32.totalorder %s112, %s113
      %p125 = scmp.eq.s32.totalorder %s21, 1
      %p126 = por %p124, %p125
      %p128 = scmp.ne.s32.totalorder %s113, %s127
      %p129 = scmp.eq.s32.totalorder %s21, 0
      %p130 = por %p128, %p129
      %s132 = sadd.s32 %s131, 1
      %p135 = scmp.eq.s32.totalorder %s15, 1
      %p136 = scmp.ne.s32.totalorder %s131, %s133
      %p137 = scmp.eq.s32.totalorder %s15, 0
      %p138 = por %p136, %p137
      %p139 = scmp.ne.s32.totalorder %s131, %s133
      %p140 = scmp.eq.s32.totalorder %s20, 1
      %p141 = por %p139, %p140
      %p142 = scmp.ne.s32.totalorder %s133, %s134
      %p143 = scmp.eq.s32.totalorder %s20, 0
      %p144 = por %p142, %p143
      %p145 = scmp.ne.s32.totalorder %s133, %s134
      %p146 = scmp.eq.s32.totalorder %s21, 1
      %p147 = por %p145, %p146
      %p149 = scmp.ne.s32.totalorder %s134, %s148
      %p150 = scmp.eq.s32.totalorder %s21, 0
      %p151 = por %p149, %p150
      %s152 = ssub.s32 %s22, %s34
      %s153 = ssub.s32 %s23, %s30
      %s154 = sor.u32 %s152, %s153
      %p155 = scmp.eq.s32.totalorder %s154, 0
      %s157 = sadd.s32 %s156, 1
      %s158 = scalar_select %p155, %s156, %s157
      %p161 = pneg %p155
      %p162 = scmp.eq.s32.totalorder %s15, 1
      %p163 = por %p161, %p162
      %p164 = scmp.ne.s32.totalorder %s156, %s159
      %p165 = scmp.eq.s32.totalorder %s15, 0
      %p166 = por %p164, %p165
      %p167 = scmp.ne.s32.totalorder %s156, %s159
      %p168 = scmp.eq.s32.totalorder %s20, 1
      %p169 = por %p167, %p168
      %p170 = scmp.ne.s32.totalorder %s159, %s160
      %p171 = scmp.eq.s32.totalorder %s20, 0
      %p172 = por %p170, %p171
      %p173 = scmp.ne.s32.totalorder %s159, %s160
      %p174 = scmp.eq.s32.totalorder %s21, 1
      %p175 = por %p173, %p174
      %p177 = scmp.ne.s32.totalorder %s160, %s176
      %p178 = scmp.eq.s32.totalorder %s21, 0
      %p179 = por %p177, %p178
      %p180 = scmp.le.s32.totalorder 1, %s15
      %p181 = scmp.lt.s32.totalorder %s15, 3
      %p182 = pnand %p180, %p181
      %p183 = pneg %p182
      // Predicated region
      $region9: #{tpu_custom_call.1} parent=5 // pred_check
        _
      $region10: #{tpu_custom_call.1} parent=5 // pred_check_branch
        %185 = sbr.rel (%p182) target = $region12
      $region11: #{tpu_custom_call.1} parent=5 // pred_region
        %s186 = ssub.s32 %s15, 1
        // Predicated region
        $region13: #{tpu_custom_call.1} parent=11 // pred_check
          %p187 = pneg %p81
        $region14: #{tpu_custom_call.1} parent=11 // pred_check_branch
          %189 = sbr.rel (%p187) target = $region16
        $region15: #{tpu_custom_call.1} parent=11 // pred_region
          %s190 = smul.u32 2, %s25
          %s192 = ssub.s32 256, 256
          %193 = vsyncadd [#allocation5], %s192
          %s194 = smul.addr %s190, 128
          %s195 = scalar_lea.hbm %s1, %s194
          %s197 = sshll.u32 [#allocation4], 4
          %s198 = int_to_ptr.vmem [resolvable:$true] %s197
          %200 = dma.hbm_to_vmem [thread:$0]  %s195, 256, %s198, [#allocation5]
        $region16: #{tpu_custom_call.1} parent=11 // pred_fallthru
          _
        // Predicated region
        $region17: #{tpu_custom_call.1} parent=11 // pred_check
          %p201 = pneg %p102
        $region18: #{tpu_custom_call.1} parent=11 // pred_check_branch
          %203 = sbr.rel (%p201) target = $region20
        $region19: #{tpu_custom_call.1} parent=11 // pred_region
          %s205 = ssub.s32 128, 128
          %206 = vsyncadd [#allocation5], %s205
          %s208 = sshll.u32 [#allocation6], 4
          %s209 = int_to_ptr.vmem [resolvable:$true] %s208
          %211 = dma.hbm_to_vmem [thread:$0]  %s2, 128, %s209, [#allocation5]
        $region20: #{tpu_custom_call.1} parent=11 // pred_fallthru
          _
        // Predicated region
        $region21: #{tpu_custom_call.1} parent=11 // pred_check
          %p212 = pneg %p123
        $region22: #{tpu_custom_call.1} parent=11 // pred_check_branch
          %214 = sbr.rel (%p212) target = $region24
        $region23: #{tpu_custom_call.1} parent=11 // pred_region
          _
        $region24: #{tpu_custom_call.1} parent=11 // pred_fallthru
          _
        // Predicated region
        $region25: #{tpu_custom_call.1} parent=11 // pred_check
          %p215 = pneg %p144
        $region26: #{tpu_custom_call.1} parent=11 // pred_check_branch
          %217 = sbr.rel (%p215) target = $region28
        $region27: #{tpu_custom_call.1} parent=11 // pred_region
          _
        $region28: #{tpu_custom_call.1} parent=11 // pred_fallthru
          _
      $region12: #{tpu_custom_call.1} parent=5 // pred_fallthru
        _
      %p218 = scmp.lt.s32.totalorder %s15, 2
      // Predicated region
      $region29: #{tpu_custom_call.1} parent=5 // pred_check
        %p219 = pneg %p218
      $region30: #{tpu_custom_call.1} parent=5 // pred_check_branch
        %221 = sbr.rel (%p219) target = $region32
      $region31: #{tpu_custom_call.1} parent=5 // pred_region
        // Predicated region
        $region33: #{tpu_custom_call.1} parent=31 // pred_check
          %p222 = pneg %p49
        $region34: #{tpu_custom_call.1} parent=31 // pred_check_branch
          %224 = sbr.rel (%p222) target = $region36
        $region35: #{tpu_custom_call.1} parent=31 // pred_region
          %s225 = sand.u32 %s39, 1
          %s226 = scalar_lea.sflag [#allocation3], %s225
          %s227 = sand.u32 %s39, 1
          %s228 = smul.addr %s227, 16
          %s229 = scalar_lea.vmem [#allocation2], %s228
          %s230 = smul.u32 2, %s23
          %s232 = ssub.s32 256, 256
          %233 = vsyncadd %s226, %s232
          %s234 = smul.addr %s22, 2
          %s235 = sadd.s32 %s230, %s234
          %s236 = smul.addr %s235, 128
          %s237 = scalar_lea.hbm %s0, %s236
          %s239 = sshll.u32 %s229, 4
          %s240 = int_to_ptr.vmem [resolvable:$true] %s239
          %242 = dma.hbm_to_vmem [thread:$0]  %s237, 256, %s240, %s226
        $region36: #{tpu_custom_call.1} parent=31 // pred_fallthru
          _
      $region32: #{tpu_custom_call.1} parent=5 // pred_fallthru
        _
      %p243 = scmp.le.s32.totalorder 1, %s15
      %p244 = scmp.lt.s32.totalorder %s15, 3
      %p245 = pnand %p243, %p244
      %p246 = pneg %p245
      // Predicated region
      $region37: #{tpu_custom_call.1} parent=5 // pred_check
        _
      $region38: #{tpu_custom_call.1} parent=5 // pred_check_branch
        %248 = sbr.rel (%p245) target = $region40
      $region39: #{tpu_custom_call.1} parent=5 // pred_region
        %s249 = ssub.s32 %s15, 1
        %s250 = sand.u32 %s42, 1
        %s251 = scalar_lea.sflag [#allocation3], %s250
        %s252 = sand.u32 %s42, 1
        %s253 = smul.addr %s252, 16
        %s254 = scalar_lea.vmem [#allocation2], %s253
        // Predicated region
        $region41: #{tpu_custom_call.1} parent=39 // pred_check
          %p255 = pneg %p55
        $region42: #{tpu_custom_call.1} parent=39 // pred_check_branch
          %257 = sbr.rel (%p255) target = $region44
        $region43: #{tpu_custom_call.1} parent=39 // pred_region
          %258 = dma.done %s251, 256
        $region44: #{tpu_custom_call.1} parent=39 // pred_fallthru
          _
        // Predicated region
        $region45: #{tpu_custom_call.1} parent=39 // pred_check
          %p259 = pneg %p81
        $region46: #{tpu_custom_call.1} parent=39 // pred_check_branch
          %261 = sbr.rel (%p259) target = $region48
        $region47: #{tpu_custom_call.1} parent=39 // pred_region
          %262 = dma.done [#allocation5], 256
        $region48: #{tpu_custom_call.1} parent=39 // pred_fallthru
          _
        // Predicated region
        $region49: #{tpu_custom_call.1} parent=39 // pred_check
          %p263 = pneg %p102
        $region50: #{tpu_custom_call.1} parent=39 // pred_check_branch
          %265 = sbr.rel (%p263) target = $region52
        $region51: #{tpu_custom_call.1} parent=39 // pred_region
          %266 = dma.done [#allocation5], 128
        $region52: #{tpu_custom_call.1} parent=39 // pred_fallthru
          _
        %s267 = sand.u32 %s42, 1
        %s268 = scalar_lea.sflag [#allocation3], %s267
        %s269 = sand.u32 %s42, 1
        %s270 = smul.addr %s269, 16
        %s271 = scalar_lea.vmem [#allocation2], %s270
        %p272 = pneg %p55
        %p273 = pneg %p52
        %p274 = pneg %p81
        %p275 = pneg %p78
        %p276 = pneg %p102
        %p277 = pneg %p99
        %p278 = pneg %p123
        %p279 = pneg %p120
        %p280 = pneg %p144
        %p281 = pneg %p141
        %p282 = pneg %p172
        %p283 = pneg %p169
        %s284 = smul.u32 32, %s25
        %p285 = scmp.lt.s32.totalorder %s24, 1
        %s286 = scalar_select %p285, %s24, 1
        %p287 = scmp.lt.s32.totalorder %s284, 31
        %s288 = scalar_select %p287, %s284, 31
        %s289 = smul.addr %s286, 32
        %s290 = sadd.s32 %s288, %s289
        %s291 = smul.addr %s290, 8
        %s292 = scalar_lea.vmem %s5, %s291
        %s293 = smul.u32 2, %s25
        %s294 = smul.u32 2, %s25
        %s295 = smul.u32 32, %s25
        %p296 = scmp.lt.s32.totalorder %s24, 1
        %s297 = scalar_select %p296, %s24, 1
        %p298 = scmp.lt.s32.totalorder %s295, 31
        %s299 = scalar_select %p298, %s295, 31
        %s300 = smul.addr %s297, 32
        %s301 = sadd.s32 %s299, %s300
        %s302 = smul.addr %s301, 8
        %s303 = scalar_lea.vmem %s5, %s302
        %s304 = smul.u32 32, %s25
        %v305 = vld [vmem:[%s254] sm:$0xff]
        %v306 = vld [vmem:[%s254 + $0x8] sm:$0xff]
        %v307 = vld [vmem:[#allocation6] sm:$0xff]
        %v308 = vld [vmem:[#allocation4] sm:$0xff]
        %v309 = vld [vmem:[#allocation4 + $0x8] sm:$0xff]
        %v310 = vld [vmem:[%s3] sm:$0xff]
        %311 = vxpose.xlu0.b32.start [1/16] %v308, 128
        %312 = vxpose.xlu0.b32.cont [2/16] 0.0, 128
        %313 = vxpose.xlu0.b32.cont [3/16] 0.0, 128
        %314 = vxpose.xlu0.b32.cont [4/16] 0.0, 128
        %315 = vxpose.xlu0.b32.cont [5/16] 0.0, 128
        %316 = vxpose.xlu0.b32.cont [6/16] 0.0, 128
        %317 = vxpose.xlu0.b32.cont [7/16] 0.0, 128
        %318 = vxpose.xlu0.b32.cont [8/16] 0.0, 128
        %319 = vxpose.xlu0.b32.cont [9/16] 0.0, 128
        %320 = vxpose.xlu0.b32.cont [10/16] 0.0, 128
        %321 = vxpose.xlu0.b32.cont [11/16] 0.0, 128
        %322 = vxpose.xlu0.b32.cont [12/16] 0.0, 128
        %323 = vxpose.xlu0.b32.cont [13/16] 0.0, 128
        %324 = vxpose.xlu0.b32.cont [14/16] 0.0, 128
        %325 = vxpose.xlu0.b32.cont [15/16] 0.0, 128
        %326 = vxpose.xlu0.b32.end [16/16] 0.0, 128
        %v327 = vpop.trf.xlu0
        %v328 = vpop.trf.xlu0
        %v329 = vpop.trf.xlu0
        %v330 = vpop.trf.xlu0
        %v331 = vpop.trf.xlu0
        %v332 = vpop.trf.xlu0
        %v333 = vpop.trf.xlu0
        %v334 = vpop.trf.xlu0
        %v335 = vpop.trf.xlu0
        %v336 = vpop.trf.xlu0
        %v337 = vpop.trf.xlu0
        %v338 = vpop.trf.xlu0
        %v339 = vpop.trf.xlu0
        %v340 = vpop.trf.xlu0
        %v341 = vpop.trf.xlu0
        %v342 = vpop.trf.xlu0
        %343 = vxpose.xlu0.b32.start [1/16] %v309, 128
        %344 = vxpose.xlu0.b32.cont [2/16] 0.0, 128
        %345 = vxpose.xlu0.b32.cont [3/16] 0.0, 128
        %346 = vxpose.xlu0.b32.cont [4/16] 0.0, 128
        %347 = vxpose.xlu0.b32.cont [5/16] 0.0, 128
        %348 = vxpose.xlu0.b32.cont [6/16] 0.0, 128
        %349 = vxpose.xlu0.b32.cont [7/16] 0.0, 128
        %350 = vxpose.xlu0.b32.cont [8/16] 0.0, 128
        %351 = vxpose.xlu0.b32.cont [9/16] 0.0, 128
        %352 = vxpose.xlu0.b32.cont [10/16] 0.0, 128
        %353 = vxpose.xlu0.b32.cont [11/16] 0.0, 128
        %354 = vxpose.xlu0.b32.cont [12/16] 0.0, 128
        %355 = vxpose.xlu0.b32.cont [13/16] 0.0, 128
        %356 = vxpose.xlu0.b32.cont [14/16] 0.0, 128
        %357 = vxpose.xlu0.b32.cont [15/16] 0.0, 128
        %358 = vxpose.xlu0.b32.end [16/16] 0.0, 128
        %v359 = vpop.trf.xlu0
        %v360 = vpop.trf.xlu0
        %v361 = vpop.trf.xlu0
        %v362 = vpop.trf.xlu0
        %v363 = vpop.trf.xlu0
        %v364 = vpop.trf.xlu0
        %v365 = vpop.trf.xlu0
        %v366 = vpop.trf.xlu0
        %v367 = vpop.trf.xlu0
        %v368 = vpop.trf.xlu0
        %v369 = vpop.trf.xlu0
        %v370 = vpop.trf.xlu0
        %v371 = vpop.trf.xlu0
        %v372 = vpop.trf.xlu0
        %v373 = vpop.trf.xlu0
        %v374 = vpop.trf.xlu0
        %vm375 = vcmask 64512
        %v377 = vsel %vm375, %v327, 0
        %v380 = vsel %vm375, %v328, 0
        %v383 = vsel %vm375, %v329, 0
        %v386 = vsel %vm375, %v330, 0
        %v389 = vsel %vm375, %v331, 0
        %v392 = vsel %vm375, %v332, 0
        %v395 = vsel %vm375, %v333, 0
        %v398 = vsel %vm375, %v334, 0
        %v401 = vsel %vm375, %v335, 0
        %v404 = vsel %vm375, %v336, 0
        %v407 = vsel %vm375, %v337, 0
        %v410 = vsel %vm375, %v338, 0
        %v413 = vsel %vm375, %v339, 0
        %v416 = vsel %vm375, %v340, 0
        %v419 = vsel %vm375, %v341, 0
        %v422 = vsel %vm375, %v342, 0
        %v425 = vsel %vm375, %v359, 0
        %v428 = vsel %vm375, %v360, 0
        %v431 = vsel %vm375, %v361, 0
        %v434 = vsel %vm375, %v362, 0
        %v437 = vsel %vm375, %v363, 0
        %v440 = vsel %vm375, %v364, 0
        %v443 = vsel %vm375, %v365, 0
        %v446 = vsel %vm375, %v366, 0
        %v449 = vsel %vm375, %v367, 0
        %v452 = vsel %vm375, %v368, 0
        %v455 = vsel %vm375, %v369, 0
        %v458 = vsel %vm375, %v370, 0
        %v461 = vsel %vm375, %v371, 0
        %v464 = vsel %vm375, %v372, 0
        %v467 = vsel %vm375, %v373, 0
        %v470 = vsel %vm375, %v374, 0
        %472 = vmatprep.subr.mxu0 0.0
        %473 = vmatpush1.msra.mxu0 %v310
        %474 = vmatprep.subr.mxu0 0.0
        %475 = vmatpush1.msra.mxu0 0.0
        %476 = vmatprep.subr.mxu0 0.0
        %477 = vmatpush1.msra.mxu0 0.0
        %478 = vmatprep.subr.mxu0 0.0
        %479 = vmatpush1.msra.mxu0 0.0
        %480 = vmatprep.subr.mxu0 0.0
        %481 = vmatpush1.msra.mxu0 0.0
        %482 = vmatprep.subr.mxu0 0.0
        %483 = vmatpush1.msra.mxu0 0.0
        %484 = vmatprep.subr.mxu0 0.0
        %485 = vmatpush1.msra.mxu0 0.0
        %486 = vmatprep.subr.mxu0 0.0
        %487 = vmatpush1.msra.mxu0 0.0
        %488 = vmatprep.subr.mxu0 0.0
        %489 = vmatpush1.msra.mxu0 0.0
        %490 = vmatprep.subr.mxu0 0.0
        %491 = vmatpush1.msra.mxu0 0.0
        %492 = vmatprep.subr.mxu0 0.0
        %493 = vmatpush1.msra.mxu0 0.0
        %494 = vmatprep.subr.mxu0 0.0
        %495 = vmatpush1.msra.mxu0 0.0
        %496 = vmatprep.subr.mxu0 0.0
        %497 = vmatpush1.msra.mxu0 0.0
        %498 = vmatprep.subr.mxu0 0.0
        %499 = vmatpush1.msra.mxu0 0.0
        %500 = vmatprep.subr.mxu0 0.0
        %501 = vmatpush1.msra.mxu0 0.0
        %502 = vmatprep.subr.mxu0 0.0
        %503 = vmatpush1.msra.mxu0 0.0
        %504 = vmatprep.subr.mxu0 0.0
        %505 = vmatpush1.msra.mxu0 0.0
        %506 = vmatprep.subr.mxu0 0.0
        %507 = vmatpush1.msra.mxu0 0.0
        %508 = vmatprep.subr.mxu0 0.0
        %509 = vmatpush1.msra.mxu0 0.0
        %510 = vmatprep.subr.mxu0 0.0
        %511 = vmatpush1.msra.mxu0 0.0
        %512 = vmatprep.subr.mxu0 0.0
        %513 = vmatpush1.msra.mxu0 0.0
        %514 = vmatprep.subr.mxu0 0.0
        %515 = vmatpush1.msra.mxu0 0.0
        %516 = vmatprep.subr.mxu0 0.0
        %517 = vmatpush1.msra.mxu0 0.0
        %518 = vmatprep.subr.mxu0 0.0
        %519 = vmatpush1.msra.mxu0 0.0
        %520 = vmatprep.subr.mxu0 0.0
        %521 = vmatpush1.msra.mxu0 0.0
        %522 = vmatprep.subr.mxu0 0.0
        %523 = vmatpush1.msra.mxu0 0.0
        %524 = vmatprep.subr.mxu0 0.0
        %525 = vmatpush1.msra.mxu0 0.0
        %526 = vmatprep.subr.mxu0 0.0
        %527 = vmatpush1.msra.mxu0 0.0
        %528 = vmatprep.subr.mxu0 0.0
        %529 = vmatpush1.msra.mxu0 0.0
        %530 = vmatprep.subr.mxu0 0.0
        %531 = vmatpush1.msra.mxu0 0.0
        %532 = vmatprep.subr.mxu0 0.0
        %533 = vmatpush1.msra.mxu0 0.0
        %534 = vmatprep.subr.mxu0 0.0
        %535 = vmatpush1.msra.mxu0 0.0
        %536 = vmatprep.mubr.f32.mxu0 0.0
        %537 = vmatmul.mubr.f32.gmra.mrb[0].mxu0 %v377
        %v538 = vpop.f32.mrb[0].mxu0
        %v539 = vadd.f32 0.0, %v538
        %v540 = vpop.f32.mrb[0].mxu0
        %541 = vmatprep.mubr.f32.mxu0 0.0
        %542 = vmatmul.mubr.f32.gmra.mrb[0].mxu0 %v380
        %v543 = vpop.f32.mrb[0].mxu0
        %v544 = vadd.f32 0.0, %v543
        %v545 = vpop.f32.mrb[0].mxu0
        %546 = vmatprep.mubr.f32.mxu0 0.0
        %547 = vmatmul.mubr.f32.gmra.mrb[0].mxu0 %v383
        %v548 = vpop.f32.mrb[0].mxu0
        %v549 = vadd.f32 0.0, %v548
        %v550 = vpop.f32.mrb[0].mxu0
        %551 = vmatprep.mubr.f32.mxu0 0.0
        %552 = vmatmul.mubr.f32.gmra.mrb[0].mxu0 %v386
        %v553 = vpop.f32.mrb[0].mxu0
        %v554 = vadd.f32 0.0, %v553
        %v555 = vpop.f32.mrb[0].mxu0
        %556 = vmatprep.mubr.f32.mxu0 0.0
        %557 = vmatmul.mubr.f32.gmra.mrb[0].mxu0 %v389
        %v558 = vpop.f32.mrb[0].mxu0
        %v559 = vadd.f32 0.0, %v558
        %v560 = vpop.f32.mrb[0].mxu0
        %561 = vmatprep.mubr.f32.mxu0 0.0
        %562 = vmatmul.mubr.f32.gmra.mrb[0].mxu0 %v392
        %v563 = vpop.f32.mrb[0].mxu0
        %v564 = vadd.f32 0.0, %v563
        %v565 = vpop.f32.mrb[0].mxu0
        %566 = vmatprep.mubr.f32.mxu0 0.0
        %567 = vmatmul.mubr.f32.gmra.mrb[0].mxu0 %v395
        %v568 = vpop.f32.mrb[0].mxu0
        %v569 = vadd.f32 0.0, %v568
        %v570 = vpop.f32.mrb[0].mxu0
        %571 = vmatprep.mubr.f32.mxu0 0.0
        %572 = vmatmul.mubr.f32.gmra.mrb[0].mxu0 %v398
        %v573 = vpop.f32.mrb[0].mxu0
        %v574 = vadd.f32 0.0, %v573
        %v575 = vpop.f32.mrb[0].mxu0
        %576 = vmatprep.mubr.f32.mxu0 0.0
        %577 = vmatmul.mubr.f32.gmra.mrb[0].mxu0 %v401
        %v578 = vpop.f32.mrb[0].mxu0
        %v579 = vadd.f32 0.0, %v578
        %v580 = vpop.f32.mrb[0].mxu0
        %581 = vmatprep.mubr.f32.mxu0 0.0
        %582 = vmatmul.mubr.f32.gmra.mrb[0].mxu0 %v404
        %v583 = vpop.f32.mrb[0].mxu0
        %v584 = vadd.f32 0.0, %v583
        %v585 = vpop.f32.mrb[0].mxu0
        %586 = vmatprep.mubr.f32.mxu0 0.0
        %587 = vmatmul.mubr.f32.gmra.mrb[0].mxu0 %v407
        %v588 = vpop.f32.mrb[0].mxu0
        %v589 = vadd.f32 0.0, %v588
        %v590 = vpop.f32.mrb[0].mxu0
        %591 = vmatprep.mubr.f32.mxu0 0.0
        %592 = vmatmul.mubr.f32.gmra.mrb[0].mxu0 %v410
        %v593 = vpop.f32.mrb[0].mxu0
        %v594 = vadd.f32 0.0, %v593
        %v595 = vpop.f32.mrb[0].mxu0
        %596 = vmatprep.mubr.f32.mxu0 0.0
        %597 = vmatmul.mubr.f32.gmra.mrb[0].mxu0 %v413
        %v598 = vpop.f32.mrb[0].mxu0
        %v599 = vadd.f32 0.0, %v598
        %v600 = vpop.f32.mrb[0].mxu0
        %601 = vmatprep.mubr.f32.mxu0 0.0
        %602 = vmatmul.mubr.f32.gmra.mrb[0].mxu0 %v416
        %v603 = vpop.f32.mrb[0].mxu0
        %v604 = vadd.f32 0.0, %v603
        %v605 = vpop.f32.mrb[0].mxu0
        %606 = vmatprep.mubr.f32.mxu0 0.0
        %607 = vmatmul.mubr.f32.gmra.mrb[0].mxu0 %v419
        %v608 = vpop.f32.mrb[0].mxu0
        %v609 = vadd.f32 0.0, %v608
        %v610 = vpop.f32.mrb[0].mxu0
        %611 = vmatprep.mubr.f32.mxu0 0.0
        %612 = vmatmul.mubr.f32.gmra.mrb[0].mxu0 %v422
        %v613 = vpop.f32.mrb[0].mxu0
        %v614 = vadd.f32 0.0, %v613
        %v615 = vpop.f32.mrb[0].mxu0
        %616 = vmatprep.mubr.f32.mxu0 0.0
        %617 = vmatmul.mubr.f32.gmra.mrb[0].mxu0 %v425
        %v618 = vpop.f32.mrb[0].mxu0
        %v619 = vadd.f32 0.0, %v618
        %v620 = vpop.f32.mrb[0].mxu0
        %621 = vmatprep.mubr.f32.mxu0 0.0
        %622 = vmatmul.mubr.f32.gmra.mrb[0].mxu0 %v428
        %v623 = vpop.f32.mrb[0].mxu0
        %v624 = vadd.f32 0.0, %v623
        %v625 = vpop.f32.mrb[0].mxu0
        %626 = vmatprep.mubr.f32.mxu0 0.0
        %627 = vmatmul.mubr.f32.gmra.mrb[0].mxu0 %v431
        %v628 = vpop.f32.mrb[0].mxu0
        %v629 = vadd.f32 0.0, %v628
        %v630 = vpop.f32.mrb[0].mxu0
        %631 = vmatprep.mubr.f32.mxu0 0.0
        %632 = vmatmul.mubr.f32.gmra.mrb[0].mxu0 %v434
        %v633 = vpop.f32.mrb[0].mxu0
        %v634 = vadd.f32 0.0, %v633
        %v635 = vpop.f32.mrb[0].mxu0
        %636 = vmatprep.mubr.f32.mxu0 0.0
        %637 = vmatmul.mubr.f32.gmra.mrb[0].mxu0 %v437
        %v638 = vpop.f32.mrb[0].mxu0
        %v639 = vadd.f32 0.0, %v638
        %v640 = vpop.f32.mrb[0].mxu0
        %641 = vmatprep.mubr.f32.mxu0 0.0
        %642 = vmatmul.mubr.f32.gmra.mrb[0].mxu0 %v440
        %v643 = vpop.f32.mrb[0].mxu0
        %v644 = vadd.f32 0.0, %v643
        %v645 = vpop.f32.mrb[0].mxu0
        %646 = vmatprep.mubr.f32.mxu0 0.0
        %647 = vmatmul.mubr.f32.gmra.mrb[0].mxu0 %v443
        %v648 = vpop.f32.mrb[0].mxu0
        %v649 = vadd.f32 0.0, %v648
        %v650 = vpop.f32.mrb[0].mxu0
        %651 = vmatprep.mubr.f32.mxu0 0.0
        %652 = vmatmul.mubr.f32.gmra.mrb[0].mxu0 %v446
        %v653 = vpop.f32.mrb[0].mxu0
        %v654 = vadd.f32 0.0, %v653
        %v655 = vpop.f32.mrb[0].mxu0
        %656 = vmatprep.mubr.f32.mxu0 0.0
        %657 = vmatmul.mubr.f32.gmra.mrb[0].mxu0 %v449
        %v658 = vpop.f32.mrb[0].mxu0
        %v659 = vadd.f32 0.0, %v658
        %v660 = vpop.f32.mrb[0].mxu0
        %661 = vmatprep.mubr.f32.mxu0 0.0
        %662 = vmatmul.mubr.f32.gmra.mrb[0].mxu0 %v452
        %v663 = vpop.f32.mrb[0].mxu0
        %v664 = vadd.f32 0.0, %v663
        %v665 = vpop.f32.mrb[0].mxu0
        %666 = vmatprep.mubr.f32.mxu0 0.0
        %667 = vmatmul.mubr.f32.gmra.mrb[0].mxu0 %v455
        %v668 = vpop.f32.mrb[0].mxu0
        %v669 = vadd.f32 0.0, %v668
        %v670 = vpop.f32.mrb[0].mxu0
        %671 = vmatprep.mubr.f32.mxu0 0.0
        %672 = vmatmul.mubr.f32.gmra.mrb[0].mxu0 %v458
        %v673 = vpop.f32.mrb[0].mxu0
        %v674 = vadd.f32 0.0, %v673
        %v675 = vpop.f32.mrb[0].mxu0
        %676 = vmatprep.mubr.f32.mxu0 0.0
        %677 = vmatmul.mubr.f32.gmra.mrb[0].mxu0 %v461
        %v678 = vpop.f32.mrb[0].mxu0
        %v679 = vadd.f32 0.0, %v678
        %v680 = vpop.f32.mrb[0].mxu0
        %681 = vmatprep.mubr.f32.mxu0 0.0
        %682 = vmatmul.mubr.f32.gmra.mrb[0].mxu0 %v464
        %v683 = vpop.f32.mrb[0].mxu0
        %v684 = vadd.f32 0.0, %v683
        %v685 = vpop.f32.mrb[0].mxu0
        %686 = vmatprep.mubr.f32.mxu0 0.0
        %687 = vmatmul.mubr.f32.gmra.mrb[0].mxu0 %v467
        %v688 = vpop.f32.mrb[0].mxu0
        %v689 = vadd.f32 0.0, %v688
        %v690 = vpop.f32.mrb[0].mxu0
        %691 = vmatprep.mubr.f32.mxu0 0.0
        %692 = vmatmul.mubr.f32.gmra.mrb[0].mxu0 %v470
        %v693 = vpop.f32.mrb[0].mxu0
        %v694 = vadd.f32 0.0, %v693
        %v695 = vpop.f32.mrb[0].mxu0
        %696 = vdwg.mxu0
        %697 = vxpose.xlu0.b32.start [1/16] %v305, 128
        %698 = vxpose.xlu0.b32.cont [2/16] 0.0, 128
        %699 = vxpose.xlu0.b32.cont [3/16] 0.0, 128
        %700 = vxpose.xlu0.b32.cont [4/16] 0.0, 128
        %701 = vxpose.xlu0.b32.cont [5/16] 0.0, 128
        %702 = vxpose.xlu0.b32.cont [6/16] 0.0, 128
        %703 = vxpose.xlu0.b32.cont [7/16] 0.0, 128
        %704 = vxpose.xlu0.b32.cont [8/16] 0.0, 128
        %705 = vxpose.xlu0.b32.cont [9/16] 0.0, 128
        %706 = vxpose.xlu0.b32.cont [10/16] 0.0, 128
        %707 = vxpose.xlu0.b32.cont [11/16] 0.0, 128
        %708 = vxpose.xlu0.b32.cont [12/16] 0.0, 128
        %709 = vxpose.xlu0.b32.cont [13/16] 0.0, 128
        %710 = vxpose.xlu0.b32.cont [14/16] 0.0, 128
        %711 = vxpose.xlu0.b32.cont [15/16] 0.0, 128
        %712 = vxpose.xlu0.b32.end [16/16] 0.0, 128
        %v713 = vpop.trf.xlu0
        %v714 = vpop.trf.xlu0
        %v715 = vpop.trf.xlu0
        %v716 = vpop.trf.xlu0
        %v717 = vpop.trf.xlu0
        %v718 = vpop.trf.xlu0
        %v719 = vpop.trf.xlu0
        %v720 = vpop.trf.xlu0
        %v721 = vpop.trf.xlu0
        %v722 = vpop.trf.xlu0
        %v723 = vpop.trf.xlu0
        %v724 = vpop.trf.xlu0
        %v725 = vpop.trf.xlu0
        %v726 = vpop.trf.xlu0
        %v727 = vpop.trf.xlu0
        %v728 = vpop.trf.xlu0
        %729 = vxpose.xlu0.b32.start [1/16] %v306, 128
        %730 = vxpose.xlu0.b32.cont [2/16] 0.0, 128
        %731 = vxpose.xlu0.b32.cont [3/16] 0.0, 128
        %732 = vxpose.xlu0.b32.cont [4/16] 0.0, 128
        %733 = vxpose.xlu0.b32.cont [5/16] 0.0, 128
        %734 = vxpose.xlu0.b32.cont [6/16] 0.0, 128
        %735 = vxpose.xlu0.b32.cont [7/16] 0.0, 128
        %736 = vxpose.xlu0.b32.cont [8/16] 0.0, 128
        %737 = vxpose.xlu0.b32.cont [9/16] 0.0, 128
        %738 = vxpose.xlu0.b32.cont [10/16] 0.0, 128
        %739 = vxpose.xlu0.b32.cont [11/16] 0.0, 128
        %740 = vxpose.xlu0.b32.cont [12/16] 0.0, 128
        %741 = vxpose.xlu0.b32.cont [13/16] 0.0, 128
        %742 = vxpose.xlu0.b32.cont [14/16] 0.0, 128
        %743 = vxpose.xlu0.b32.cont [15/16] 0.0, 128
        %744 = vxpose.xlu0.b32.end [16/16] 0.0, 128
        %v745 = vpop.trf.xlu0
        %v746 = vpop.trf.xlu0
        %v747 = vpop.trf.xlu0
        %v748 = vpop.trf.xlu0
        %v749 = vpop.trf.xlu0
        %v750 = vpop.trf.xlu0
        %v751 = vpop.trf.xlu0
        %v752 = vpop.trf.xlu0
        %v753 = vpop.trf.xlu0
        %v754 = vpop.trf.xlu0
        %v755 = vpop.trf.xlu0
        %v756 = vpop.trf.xlu0
        %v757 = vpop.trf.xlu0
        %v758 = vpop.trf.xlu0
        %v759 = vpop.trf.xlu0
        %v760 = vpop.trf.xlu0
        %v762 = vsel %vm375, %v713, 0
        %v765 = vsel %vm375, %v714, 0
        %v768 = vsel %vm375, %v715, 0
        %v771 = vsel %vm375, %v716, 0
        %v774 = vsel %vm375, %v717, 0
        %v777 = vsel %vm375, %v718, 0
        %v780 = vsel %vm375, %v719, 0
        %v783 = vsel %vm375, %v720, 0
        %v786 = vsel %vm375, %v721, 0
        %v789 = vsel %vm375, %v722, 0
        %v792 = vsel %vm375, %v723, 0
        %v795 = vsel %vm375, %v724, 0
        %v798 = vsel %vm375, %v725, 0
        %v801 = vsel %vm375, %v726, 0
        %v804 = vsel %vm375, %v727, 0
        %v807 = vsel %vm375, %v728, 0
        %v810 = vsel %vm375, %v745, 0
        %v813 = vsel %vm375, %v746, 0
        %v816 = vsel %vm375, %v747, 0
        %v819 = vsel %vm375, %v748, 0
        %v822 = vsel %vm375, %v749, 0
        %v825 = vsel %vm375, %v750, 0
        %v828 = vsel %vm375, %v751, 0
        %v831 = vsel %vm375, %v752, 0
        %v834 = vsel %vm375, %v753, 0
        %v837 = vsel %vm375, %v754, 0
        %v840 = vsel %vm375, %v755, 0
        %v843 = vsel %vm375, %v756, 0
        %v846 = vsel %vm375, %v757, 0
        %v849 = vsel %vm375, %v758, 0
        %v852 = vsel %vm375, %v759, 0
        %v855 = vsel %vm375, %v760, 0
        %857 = vmatprep.subr.mxu0 0.0
        %858 = vmatpush1.msra.mxu0 %v307
        %859 = vmatprep.subr.mxu0 0.0
        %860 = vmatpush1.msra.mxu0 0.0
        %861 = vmatprep.subr.mxu0 0.0
        %862 = vmatpush1.msra.mxu0 0.0
        %863 = vmatprep.subr.mxu0 0.0
        %864 = vmatpush1.msra.mxu0 0.0
        %865 = vmatprep.subr.mxu0 0.0
        %866 = vmatpush1.msra.mxu0 0.0
        %867 = vmatprep.subr.mxu0 0.0
        %868 = vmatpush1.msra.mxu0 0.0
        %869 = vmatprep.subr.mxu0 0.0
        %870 = vmatpush1.msra.mxu0 0.0
        %871 = vmatprep.subr.mxu0 0.0
        %872 = vmatpush1.msra.mxu0 0.0
        %873 = vmatprep.subr.mxu0 0.0
        %874 = vmatpush1.msra.mxu0 0.0
        %875 = vmatprep.subr.mxu0 0.0
        %876 = vmatpush1.msra.mxu0 0.0
        %877 = vmatprep.subr.mxu0 0.0
        %878 = vmatpush1.msra.mxu0 0.0
        %879 = vmatprep.subr.mxu0 0.0
        %880 = vmatpush1.msra.mxu0 0.0
        %881 = vmatprep.subr.mxu0 0.0
        %882 = vmatpush1.msra.mxu0 0.0
        %883 = vmatprep.subr.mxu0 0.0
        %884 = vmatpush1.msra.mxu0 0.0
        %885 = vmatprep.subr.mxu0 0.0
        %886 = vmatpush1.msra.mxu0 0.0
        %887 = vmatprep.subr.mxu0 0.0
        %888 = vmatpush1.msra.mxu0 0.0
        %889 = vmatprep.subr.mxu0 0.0
        %890 = vmatpush1.msra.mxu0 0.0
        %891 = vmatprep.subr.mxu0 0.0
        %892 = vmatpush1.msra.mxu0 0.0
        %893 = vmatprep.subr.mxu0 0.0
        %894 = vmatpush1.msra.mxu0 0.0
        %895 = vmatprep.subr.mxu0 0.0
        %896 = vmatpush1.msra.mxu0 0.0
        %897 = vmatprep.subr.mxu0 0.0
        %898 = vmatpush1.msra.mxu0 0.0
        %899 = vmatprep.subr.mxu0 0.0
        %900 = vmatpush1.msra.mxu0 0.0
        %901 = vmatprep.subr.mxu0 0.0
        %902 = vmatpush1.msra.mxu0 0.0
        %903 = vmatprep.subr.mxu0 0.0
        %904 = vmatpush1.msra.mxu0 0.0
        %905 = vmatprep.subr.mxu0 0.0
        %906 = vmatpush1.msra.mxu0 0.0
        %907 = vmatprep.subr.mxu0 0.0
        %908 = vmatpush1.msra.mxu0 0.0
        %909 = vmatprep.subr.mxu0 0.0
        %910 = vmatpush1.msra.mxu0 0.0
        %911 = vmatprep.subr.mxu0 0.0
        %912 = vmatpush1.msra.mxu0 0.0
        %913 = vmatprep.subr.mxu0 0.0
        %914 = vmatpush1.msra.mxu0 0.0
        %915 = vmatprep.subr.mxu0 0.0
        %916 = vmatpush1.msra.mxu0 0.0
        %917 = vmatprep.subr.mxu0 0.0
        %918 = vmatpush1.msra.mxu0 0.0
        %919 = vmatprep.subr.mxu0 0.0
        %920 = vmatpush1.msra.mxu0 0.0
        %921 = vmatprep.mubr.f32.mxu0 0.0
        %922 = vmatmul.mubr.f32.gmra.mrb[0].mxu0 %v762
        %v923 = vpop.f32.mrb[0].mxu0
        %v924 = vadd.f32 %v539, %v923
        %v925 = vpop.f32.mrb[0].mxu0
        %926 = vmatprep.mubr.f32.mxu0 0.0
        %927 = vmatmul.mubr.f32.gmra.mrb[0].mxu0 %v765
        %v928 = vpop.f32.mrb[0].mxu0
        %v929 = vadd.f32 %v544, %v928
        %v930 = vpop.f32.mrb[0].mxu0
        %931 = vmatprep.mubr.f32.mxu0 0.0
        %932 = vmatmul.mubr.f32.gmra.mrb[0].mxu0 %v768
        %v933 = vpop.f32.mrb[0].mxu0
        %v934 = vadd.f32 %v549, %v933
        %v935 = vpop.f32.mrb[0].mxu0
        %936 = vmatprep.mubr.f32.mxu0 0.0
        %937 = vmatmul.mubr.f32.gmra.mrb[0].mxu0 %v771
        %v938 = vpop.f32.mrb[0].mxu0
        %v939 = vadd.f32 %v554, %v938
        %v940 = vpop.f32.mrb[0].mxu0
        %941 = vmatprep.mubr.f32.mxu0 0.0
        %942 = vmatmul.mubr.f32.gmra.mrb[0].mxu0 %v774
        %v943 = vpop.f32.mrb[0].mxu0
        %v944 = vadd.f32 %v559, %v943
        %v945 = vpop.f32.mrb[0].mxu0
        %946 = vmatprep.mubr.f32.mxu0 0.0
        %947 = vmatmul.mubr.f32.gmra.mrb[0].mxu0 %v777
        %v948 = vpop.f32.mrb[0].mxu0
        %v949 = vadd.f32 %v564, %v948
        %v950 = vpop.f32.mrb[0].mxu0
        %951 = vmatprep.mubr.f32.mxu0 0.0
        %952 = vmatmul.mubr.f32.gmra.mrb[0].mxu0 %v780
        %v953 = vpop.f32.mrb[0].mxu0
        %v954 = vadd.f32 %v569, %v953
        %v955 = vpop.f32.mrb[0].mxu0
        %956 = vmatprep.mubr.f32.mxu0 0.0
        %957 = vmatmul.mubr.f32.gmra.mrb[0].mxu0 %v783
        %v958 = vpop.f32.mrb[0].mxu0
        %v959 = vadd.f32 %v574, %v958
        %v960 = vpop.f32.mrb[0].mxu0
        %961 = vmatprep.mubr.f32.mxu0 0.0
        %962 = vmatmul.mubr.f32.gmra.mrb[0].mxu0 %v786
        %v963 = vpop.f32.mrb[0].mxu0
        %v964 = vadd.f32 %v579, %v963
        %v965 = vpop.f32.mrb[0].mxu0
        %966 = vmatprep.mubr.f32.mxu0 0.0
        %967 = vmatmul.mubr.f32.gmra.mrb[0].mxu0 %v789
        %v968 = vpop.f32.mrb[0].mxu0
        %v969 = vadd.f32 %v584, %v968
        %v970 = vpop.f32.mrb[0].mxu0
        %971 = vmatprep.mubr.f32.mxu0 0.0
        %972 = vmatmul.mubr.f32.gmra.mrb[0].mxu0 %v792
        %v973 = vpop.f32.mrb[0].mxu0
        %v974 = vadd.f32 %v589, %v973
        %v975 = vpop.f32.mrb[0].mxu0
        %976 = vmatprep.mubr.f32.mxu0 0.0
        %977 = vmatmul.mubr.f32.gmra.mrb[0].mxu0 %v795
        %v978 = vpop.f32.mrb[0].mxu0
        %v979 = vadd.f32 %v594, %v978
        %v980 = vpop.f32.mrb[0].mxu0
        %981 = vmatprep.mubr.f32.mxu0 0.0
        %982 = vmatmul.mubr.f32.gmra.mrb[0].mxu0 %v798
        %v983 = vpop.f32.mrb[0].mxu0
        %v984 = vadd.f32 %v599, %v983
        %v985 = vpop.f32.mrb[0].mxu0
        %986 = vmatprep.mubr.f32.mxu0 0.0
        %987 = vmatmul.mubr.f32.gmra.mrb[0].mxu0 %v801
        %v988 = vpop.f32.mrb[0].mxu0
        %v989 = vadd.f32 %v604, %v988
        %v990 = vpop.f32.mrb[0].mxu0
        %991 = vmatprep.mubr.f32.mxu0 0.0
        %992 = vmatmul.mubr.f32.gmra.mrb[0].mxu0 %v804
        %v993 = vpop.f32.mrb[0].mxu0
        %v994 = vadd.f32 %v609, %v993
        %v995 = vpop.f32.mrb[0].mxu0
        %996 = vmatprep.mubr.f32.mxu0 0.0
        %997 = vmatmul.mubr.f32.gmra.mrb[0].mxu0 %v807
        %v998 = vpop.f32.mrb[0].mxu0
        %v999 = vadd.f32 %v614, %v998
        %v1000 = vpop.f32.mrb[0].mxu0
        %1001 = vmatprep.mubr.f32.mxu0 0.0
        %1002 = vmatmul.mubr.f32.gmra.mrb[0].mxu0 %v810
        %v1003 = vpop.f32.mrb[0].mxu0
        %v1004 = vadd.f32 %v619, %v1003
        %v1005 = vpop.f32.mrb[0].mxu0
        %1006 = vmatprep.mubr.f32.mxu0 0.0
        %1007 = vmatmul.mubr.f32.gmra.mrb[0].mxu0 %v813
        %v1008 = vpop.f32.mrb[0].mxu0
        %v1009 = vadd.f32 %v624, %v1008
        %v1010 = vpop.f32.mrb[0].mxu0
        %1011 = vmatprep.mubr.f32.mxu0 0.0
        %1012 = vmatmul.mubr.f32.gmra.mrb[0].mxu0 %v816
        %v1013 = vpop.f32.mrb[0].mxu0
        %v1014 = vadd.f32 %v629, %v1013
        %v1015 = vpop.f32.mrb[0].mxu0
        %1016 = vmatprep.mubr.f32.mxu0 0.0
        %1017 = vmatmul.mubr.f32.gmra.mrb[0].mxu0 %v819
        %v1018 = vpop.f32.mrb[0].mxu0
        %v1019 = vadd.f32 %v634, %v1018
        %v1020 = vpop.f32.mrb[0].mxu0
        %1021 = vmatprep.mubr.f32.mxu0 0.0
        %1022 = vmatmul.mubr.f32.gmra.mrb[0].mxu0 %v822
        %v1023 = vpop.f32.mrb[0].mxu0
        %v1024 = vadd.f32 %v639, %v1023
        %v1025 = vpop.f32.mrb[0].mxu0
        %1026 = vmatprep.mubr.f32.mxu0 0.0
        %1027 = vmatmul.mubr.f32.gmra.mrb[0].mxu0 %v825
        %v1028 = vpop.f32.mrb[0].mxu0
        %v1029 = vadd.f32 %v644, %v1028
        %v1030 = vpop.f32.mrb[0].mxu0
        %1031 = vmatprep.mubr.f32.mxu0 0.0
        %1032 = vmatmul.mubr.f32.gmra.mrb[0].mxu0 %v828
        %v1033 = vpop.f32.mrb[0].mxu0
        %v1034 = vadd.f32 %v649, %v1033
        %v1035 = vpop.f32.mrb[0].mxu0
        %1036 = vmatprep.mubr.f32.mxu0 0.0
        %1037 = vmatmul.mubr.f32.gmra.mrb[0].mxu0 %v831
        %v1038 = vpop.f32.mrb[0].mxu0
        %v1039 = vadd.f32 %v654, %v1038
        %v1040 = vpop.f32.mrb[0].mxu0
        %1041 = vmatprep.mubr.f32.mxu0 0.0
        %1042 = vmatmul.mubr.f32.gmra.mrb[0].mxu0 %v834
        %v1043 = vpop.f32.mrb[0].mxu0
        %v1044 = vadd.f32 %v659, %v1043
        %v1045 = vpop.f32.mrb[0].mxu0
        %1046 = vmatprep.mubr.f32.mxu0 0.0
        %1047 = vmatmul.mubr.f32.gmra.mrb[0].mxu0 %v837
        %v1048 = vpop.f32.mrb[0].mxu0
        %v1049 = vadd.f32 %v664, %v1048
        %v1050 = vpop.f32.mrb[0].mxu0
        %1051 = vmatprep.mubr.f32.mxu0 0.0
        %1052 = vmatmul.mubr.f32.gmra.mrb[0].mxu0 %v840
        %v1053 = vpop.f32.mrb[0].mxu0
        %v1054 = vadd.f32 %v669, %v1053
        %v1055 = vpop.f32.mrb[0].mxu0
        %1056 = vmatprep.mubr.f32.mxu0 0.0
        %1057 = vmatmul.mubr.f32.gmra.mrb[0].mxu0 %v843
        %v1058 = vpop.f32.mrb[0].mxu0
        %v1059 = vadd.f32 %v674, %v1058
        %v1060 = vpop.f32.mrb[0].mxu0
        %1061 = vmatprep.mubr.f32.mxu0 0.0
        %1062 = vmatmul.mubr.f32.gmra.mrb[0].mxu0 %v846
        %v1063 = vpop.f32.mrb[0].mxu0
        %v1064 = vadd.f32 %v679, %v1063
        %v1065 = vpop.f32.mrb[0].mxu0
        %1066 = vmatprep.mubr.f32.mxu0 0.0
        %1067 = vmatmul.mubr.f32.gmra.mrb[0].mxu0 %v849
        %v1068 = vpop.f32.mrb[0].mxu0
        %v1069 = vadd.f32 %v684, %v1068
        %v1070 = vpop.f32.mrb[0].mxu0
        %1071 = vmatprep.mubr.f32.mxu0 0.0
        %1072 = vmatmul.mubr.f32.gmra.mrb[0].mxu0 %v852
        %v1073 = vpop.f32.mrb[0].mxu0
        %v1074 = vadd.f32 %v689, %v1073
        %v1075 = vpop.f32.mrb[0].mxu0
        %1076 = vmatprep.mubr.f32.mxu0 0.0
        %1077 = vmatmul.mubr.f32.gmra.mrb[0].mxu0 %v855
        %v1078 = vpop.f32.mrb[0].mxu0
        %v1079 = vadd.f32 %v694, %v1078
        %v1080 = vpop.f32.mrb[0].mxu0
        %1081 = vdwg.mxu0
        %v1082 = vld [vmem:[%s4] sm:$0x1]
        %v1084 = vlaneseq
        %v1085 = vshrl.u32 %v1084, 7
        %v1086 = vsub.s32 0, %v1085
        %v1087 = vrot.slane %v1082, %v1086
        %v1089 = vadd.f32 %v924, %v1087
        %v1090 = vadd.f32 %v929, %v1087
        %v1091 = vadd.f32 %v934, %v1087
        %v1092 = vadd.f32 %v939, %v1087
        %v1093 = vadd.f32 %v944, %v1087
        %v1094 = vadd.f32 %v949, %v1087
        %v1095 = vadd.f32 %v954, %v1087
        %v1096 = vadd.f32 %v959, %v1087
        %v1097 = vadd.f32 %v964, %v1087
        %v1098 = vadd.f32 %v969, %v1087
        %v1099 = vadd.f32 %v974, %v1087
        %v1100 = vadd.f32 %v979, %v1087
        %v1101 = vadd.f32 %v984, %v1087
        %v1102 = vadd.f32 %v989, %v1087
        %v1103 = vadd.f32 %v994, %v1087
        %v1104 = vadd.f32 %v999, %v1087
        %v1105 = vadd.f32 %v1004, %v1087
        %v1106 = vadd.f32 %v1009, %v1087
        %v1107 = vadd.f32 %v1014, %v1087
        %v1108 = vadd.f32 %v1019, %v1087
        %v1109 = vadd.f32 %v1024, %v1087
        %v1110 = vadd.f32 %v1029, %v1087
        %v1111 = vadd.f32 %v1034, %v1087
        %v1112 = vadd.f32 %v1039, %v1087
        %v1113 = vadd.f32 %v1044, %v1087
        %v1114 = vadd.f32 %v1049, %v1087
        %v1115 = vadd.f32 %v1054, %v1087
        %v1116 = vadd.f32 %v1059, %v1087
        %v1117 = vadd.f32 %v1064, %v1087
        %v1118 = vadd.f32 %v1069, %v1087
        %v1119 = vadd.f32 %v1074, %v1087
        %v1120 = vadd.f32 %v1079, %v1087
        %vm1121 = vcmask 261120
        %1122 = vst.msk [vmem:[%s303] sm:$0xff] %vm1121, %v1089
        %1123 = vst.msk [vmem:[%s303 + $0x8] sm:$0xff] %vm1121, %v1090
        %1124 = vst.msk [vmem:[%s303 + $0x10] sm:$0xff] %vm1121, %v1091
        %1125 = vst.msk [vmem:[%s303 + $0x18] sm:$0xff] %vm1121, %v1092
        %1126 = vst.msk [vmem:[%s303 + $0x20] sm:$0xff] %vm1121, %v1093
        %1127 = vst.msk [vmem:[%s303 + $0x28] sm:$0xff] %vm1121, %v1094
        %1128 = vst.msk [vmem:[%s303 + $0x30] sm:$0xff] %vm1121, %v1095
        %1129 = vst.msk [vmem:[%s303 + $0x38] sm:$0xff] %vm1121, %v1096
        %1130 = vst.msk [vmem:[%s303 + $0x40] sm:$0xff] %vm1121, %v1097
        %1131 = vst.msk [vmem:[%s303 + $0x48] sm:$0xff] %vm1121, %v1098
        %1132 = vst.msk [vmem:[%s303 + $0x50] sm:$0xff] %vm1121, %v1099
        %1133 = vst.msk [vmem:[%s303 + $0x58] sm:$0xff] %vm1121, %v1100
        %1134 = vst.msk [vmem:[%s303 + $0x60] sm:$0xff] %vm1121, %v1101
        %1135 = vst.msk [vmem:[%s303 + $0x68] sm:$0xff] %vm1121, %v1102
        %1136 = vst.msk [vmem:[%s303 + $0x70] sm:$0xff] %vm1121, %v1103
        %1137 = vst.msk [vmem:[%s303 + $0x78] sm:$0xff] %vm1121, %v1104
        %1138 = vst.msk [vmem:[%s303 + $0x80] sm:$0xff] %vm1121, %v1105
        %1139 = vst.msk [vmem:[%s303 + $0x88] sm:$0xff] %vm1121, %v1106
        %1140 = vst.msk [vmem:[%s303 + $0x90] sm:$0xff] %vm1121, %v1107
        %1141 = vst.msk [vmem:[%s303 + $0x98] sm:$0xff] %vm1121, %v1108
        %1142 = vst.msk [vmem:[%s303 + $0xa0] sm:$0xff] %vm1121, %v1109
        %1143 = vst.msk [vmem:[%s303 + $0xa8] sm:$0xff] %vm1121, %v1110
        %1144 = vst.msk [vmem:[%s303 + $0xb0] sm:$0xff] %vm1121, %v1111
        %1145 = vst.msk [vmem:[%s303 + $0xb8] sm:$0xff] %vm1121, %v1112
        %1146 = vst.msk [vmem:[%s303 + $0xc0] sm:$0xff] %vm1121, %v1113
        %1147 = vst.msk [vmem:[%s303 + $0xc8] sm:$0xff] %vm1121, %v1114
        %1148 = vst.msk [vmem:[%s303 + $0xd0] sm:$0xff] %vm1121, %v1115
        %1149 = vst.msk [vmem:[%s303 + $0xd8] sm:$0xff] %vm1121, %v1116
        %1150 = vst.msk [vmem:[%s303 + $0xe0] sm:$0xff] %vm1121, %v1117
        %1151 = vst.msk [vmem:[%s303 + $0xe8] sm:$0xff] %vm1121, %v1118
        %1152 = vst.msk [vmem:[%s303 + $0xf0] sm:$0xff] %vm1121, %v1119
        %1153 = vst.msk [vmem:[%s303 + $0xf8] sm:$0xff] %vm1121, %v1120
        %s1154 = smul.u32 32, %s25
        %p1155 = scmp.lt.s32.totalorder %s24, 1
        %s1156 = scalar_select %p1155, %s24, 1
        %p1157 = scmp.lt.s32.totalorder %s1154, 31
        %s1158 = scalar_select %p1157, %s1154, 31
        %s1159 = smul.addr %s1156, 32
        %s1160 = sadd.s32 %s1158, %s1159
        %s1161 = smul.addr %s1160, 8
        %s1162 = scalar_lea.vmem %s5, %s1161
        // Predicated region
        $region53: #{tpu_custom_call.1} parent=39 // pred_check
          %p1163 = pneg %p169
        $region54: #{tpu_custom_call.1} parent=39 // pred_check_branch
          %1165 = sbr.rel (%p1163) target = $region56
        $region55: #{tpu_custom_call.1} parent=39 // pred_region
          %s1166 = smul.u32 32, %s25
        $region56: #{tpu_custom_call.1} parent=39 // pred_fallthru
          _
      $region40: #{tpu_custom_call.1} parent=5 // pred_fallthru
        _
      %p1167 = scmp.le.s32.totalorder 2, %s15
      // Predicated region
      $region57: #{tpu_custom_call.1} parent=5 // pred_check
        %p1168 = pneg %p1167
      $region58: #{tpu_custom_call.1} parent=5 // pred_check_branch
        %1170 = sbr.rel (%p1168) target = $region60
      $region59: #{tpu_custom_call.1} parent=5 // pred_region
        %s1171 = ssub.s32 %s15, 2
        // Predicated region
        $region61: #{tpu_custom_call.1} parent=59 // pred_check
          %p1172 = pneg %p175
        $region62: #{tpu_custom_call.1} parent=59 // pred_check_branch
          %1174 = sbr.rel (%p1172) target = $region64
        $region63: #{tpu_custom_call.1} parent=59 // pred_region
          %s1175 = smul.u32 32, %s27
          %p1176 = scmp.lt.s32.totalorder %s26, 1
          %s1177 = scalar_select %p1176, %s26, 1
          %p1178 = scmp.lt.s32.totalorder %s1175, 31
          %s1179 = scalar_select %p1178, %s1175, 31
          %s1180 = smul.addr %s1177, 32
          %s1181 = sadd.s32 %s1179, %s1180
          %s1182 = smul.addr %s1181, 8
          %s1183 = scalar_lea.vmem %s5, %s1182
        $region64: #{tpu_custom_call.1} parent=59 // pred_fallthru
          _
      $region60: #{tpu_custom_call.1} parent=5 // pred_fallthru
        _
    $region6: #{tpu_custom_call.1} parent=1 // loop_footer
      %s19 = sadd.s32 1, %s15
    $region7: #{tpu_custom_call.1} parent=1 // loop_footer_branch
      %14 = sbr.rel target = $region3
    $region8: #{tpu_custom_call.1} parent=1 // loop_exit
      _
    %1184 = vsyncpa [#allocation3], 1
    %s1185 = scalar_lea.sflag [#allocation3], 1
    %1186 = vsyncpa %s1185, 1
    %1187 = vsyncpa [#allocation5], 1

</llo_original>
